<compile_context>
chip_gen: v6e
topology: v6e:2x2x1
jax: 0.10.0
libtpu: 0.0.40
codegen_flags: <defaults>
</compile_context>

<pallas_src>
import functools

import jax
import jax.numpy as jnp
from jax.experimental import pallas as pl
from jax.experimental.pallas import tpu as pltpu


# ---------------------------------------------------------------------------
# PE table (matches the torch register_buffer: pe[:,0::2]=sin, pe[:,1::2]=cos)
# ---------------------------------------------------------------------------
def make_positional_encoding_table(max_len, d_model, dtype=jnp.float32):
    assert d_model % 2 == 0, "d_model must be even (as in the reference buffer)"
    position = jnp.arange(max_len, dtype=jnp.float32)[:, None]                     # (L, 1)
    div_term = jnp.exp(jnp.arange(0, d_model, 2, dtype=jnp.float32)
                       * (-jnp.log(jnp.float32(10000.0)) / d_model))               # (D/2,)
    ang = position * div_term                                                      # (L, D/2)
    pe = jnp.zeros((max_len, d_model), jnp.float32)
    pe = pe.at[:, 0::2].set(jnp.sin(ang))
    pe = pe.at[:, 1::2].set(jnp.cos(ang))
    return pe.astype(dtype)


# ---------------------------------------------------------------------------
# kernels (pure jnp — no TPU-only primitives, so they also run in interpret mode)
# ---------------------------------------------------------------------------
def _pe_add_kernel(x_ref, pe_ref, o_ref):
    # x block: (ts, tb, td); pe block: (ts, td) broadcast over the batch sublanes.
    # Compute in x's native dtype (bf16 VALU on v6e/v7x; f32 inputs stay f32).
    o_ref[...] = x_ref[...] + pe_ref[...].astype(o_ref.dtype)[:, None, :]


def _pe_add_dropout_kernel(x_ref, pe_ref, keep_ref, o_ref, *, inv_keep):
    y = x_ref[...] + pe_ref[...].astype(o_ref.dtype)[:, None, :]
    # Single select + single multiply: scale is 1/keep_prob where kept, 0 where dropped.
    scale = jnp.where(keep_ref[...] != 0,
                      jnp.asarray(inv_keep, o_ref.dtype),
                      jnp.asarray(0.0, o_ref.dtype))
    o_ref[...] = y * scale


# ---------------------------------------------------------------------------
# tile picking
# ---------------------------------------------------------------------------
def _sublane_multiple(itemsize):
    # f32 -> 8, bf16/fp16 -> 16, int8/fp8 -> 32 sublane packing.
    return max(8, 32 // int(itemsize))


def _round_down(v, m):
    return max(m, (v // m) * m)


def _round_up(v, m):
    return ((v + m - 1) // m) * m


def _pick_tiles(S, B, D, *, x_itemsize, pe_itemsize, mask_itemsize=None,
                budget_bytes=6 << 20):
    """Pick (ts, tb, td) so total double-buffered VMEM (x + out + pe [+ mask]) stays
    under ~6 MiB — comfortably inside the default scoped VMEM limit on v5e (16 MiB),
    v6e (32 MiB) and v7x (32 MiB scoped / 64 MiB physical)."""
    LANE = 128
    train = mask_itemsize is not None
    # ts is the sublane dim of the pe block; tb is the sublane dim of x/out (+mask).
    sub_s = _sublane_multiple(pe_itemsize)
    sub_b = _sublane_multiple(x_itemsize)
    if train:
        sub_b = max(sub_b, _sublane_multiple(mask_itemsize))

    def resident(ts, tb, td):
        r = 2 * ts * tb * td * x_itemsize * 2          # x in + out, double-buffered
        r += 2 * ts * td * pe_itemsize                 # pe, double-buffered
        if train:
            r += 2 * ts * tb * td * mask_itemsize      # keep mask, double-buffered
        return r

    tb, td = B, D
    min_ts = min(S, sub_s)

    # Escape hatch 1: tile d_model (multiples of 128) if even a minimal seq tile
    # with full (B, D) would blow the budget.
    while D > LANE and td > LANE and resident(min_ts, tb, td) > budget_bytes:
        td = _round_down(td // 2, LANE)
    # Escape hatch 2: tile batch (multiples of the sublane packing).
    while B > sub_b and tb > sub_b and resident(min_ts, tb, td) > budget_bytes:
        tb = _round_down(tb // 2, sub_b)

    # Largest seq tile that fits the remaining budget.
    per_row = resident(1, tb, td)
    ts = min(S, max(1, budget_bytes // per_row))
    if ts < S:
        ts = _round_down(ts, sub_s)   # safe now: per_row was bounded above

    # Guarantee >= 2 grid steps when the sequence allows it (megacore on v7x).
    total_steps = pl.cdiv(S, ts) * pl.cdiv(B, tb) * pl.cdiv(D, td)
    if total_steps < 2 and S >= 2 * sub_s:
        ts = _round_up(pl.cdiv(S, 2), sub_s)

    return ts, tb, td


# ---------------------------------------------------------------------------
# wrapper
# ---------------------------------------------------------------------------
def positional_encoding(x, pe, *, dropout_p=0.0, train=False, rng_key=None):
    """x: (S, B, d_model); pe: (max_len, d_model). Returns dropout(x + pe[:S])."""
    S, Bn, D = x.shape
    max_len, Dp = pe.shape
    assert Dp == D and max_len >= S

    use_dropout = bool(train) and float(dropout_p) > 0.0
    x_it = jnp.dtype(x.dtype).itemsize
    pe_it = jnp.dtype(pe.dtype).itemsize
    mask_it = 1 if use_dropout else None

    ts, tb, td = _pick_tiles(S, Bn, D, x_itemsize=x_it, pe_itemsize=pe_it,
                             mask_itemsize=mask_it)
    grid = (pl.cdiv(S, ts), pl.cdiv(Bn, tb), pl.cdiv(D, td))

    x_spec = pl.BlockSpec((ts, tb, td), lambda s, b, d: (s, b, d))
    pe_spec = pl.BlockSpec((ts, td), lambda s, b, d: (s, d))      # batch-invariant
    out_spec = pl.BlockSpec((ts, tb, td), lambda s, b, d: (s, b, d))
    out_shape = jax.ShapeDtypeStruct((S, Bn, D), x.dtype)
    cparams = pltpu.CompilerParams(
        dimension_semantics=("parallel", "parallel", "parallel"))

    if not use_dropout:                            # eval-mode: dropout is identity
        return pl.pallas_call(
            _pe_add_kernel,
            grid=grid,
            in_specs=[x_spec, pe_spec],
            out_specs=out_spec,
            out_shape=out_shape,
            compiler_params=cparams,
        )(x, pe)

    keep_prob = 1.0 - float(dropout_p)
    if rng_key is None:
        rng_key = jax.random.PRNGKey(0)
    # TODO(synk): mask matches torch semantics (Bernoulli(1-p), 1/(1-p) scaling) but
    # not torch's RNG bitstream; an in-kernel pltpu PRNG would avoid this extra
    # 1-byte/elem HBM read but has no CPU/interpret lowering.
    keep = jax.random.bernoulli(rng_key, keep_prob, (S, Bn, D)).astype(jnp.int8)
    mask_spec = pl.BlockSpec((ts, tb, td), lambda s, b, d: (s, b, d))

    kern = functools.partial(_pe_add_dropout_kernel, inv_keep=float(1.0 / keep_prob))
    return pl.pallas_call(
        kern,
        grid=grid,
        in_specs=[x_spec, pe_spec, mask_spec],
        out_specs=out_spec,
        out_shape=out_shape,
        compiler_params=cparams,
    )(x, pe, keep)


# ---------------------------------------------------------------------------
if __name__ == "__main__":
    key = jax.random.PRNGKey(0)
    k_x, k_drop = jax.random.split(key)

    # Small shapes consistent with the module: x is (seq, batch, d_model).
    S, B, D_MODEL = 8, 2, 32
    MAX_LEN = 64            # original default 5000
    DROPOUT_P = 0.1

    x = jax.random.normal(k_x, (S, B, D_MODEL), dtype=jnp.float32)
    pe = make_positional_encoding_table(MAX_LEN, D_MODEL)

    # --- eval mode (dropout = identity), check against plain-JAX reference ---
    y_eval = positional_encoding(x, pe, dropout_p=DROPOUT_P, train=False)
    jax.block_until_ready(y_eval)
    ref = x + pe[:S][:, None, :]
    assert y_eval.shape == (S, B, D_MODEL) and y_eval.dtype == x.dtype
    assert bool(jnp.allclose(y_eval, ref, atol=1e-6)), "eval output mismatch"

    # --- train mode (mask-based dropout), sanity check the mask/scale ---
    y_train = positional_encoding(x, pe, dropout_p=DROPOUT_P, train=True,
                                  rng_key=k_drop)
    jax.block_until_ready(y_train)
    assert y_train.shape == (S, B, D_MODEL)
    inv_keep = 1.0 / (1.0 - DROPOUT_P)
    ok = jnp.where(y_train == 0.0, True,
                   jnp.isclose(y_train, ref * inv_keep, atol=1e-5))
    assert bool(jnp.all(ok)), "train-mode output is not {0, (x+pe)/keep_prob}"

    print("KERNEL_OK")
</pallas_src>

<mosaic_0001>
module attributes {stable_mosaic.version = 11 : i64} {
  func.func @_pe_add_kernel(%arg0: i32, %arg1: i32, %arg2: i32, %arg3: memref<8x2x32xf32, #tpu.memory_space<vmem>>, %arg4: memref<8x32xf32, #tpu.memory_space<vmem>>, %arg5: memref<8x2x32xf32, #tpu.memory_space<vmem>>) attributes {dimension_semantics = [#tpu.dimension_semantics<parallel>, #tpu.dimension_semantics<parallel>, #tpu.dimension_semantics<parallel>], iteration_bounds = array<i64: 1, 1, 1>, scalar_prefetch = 0 : i64, scratch_operands = 0 : i64, tpu.core_type = #tpu.core_type<tc>, window_params = [{transform_indices = @transform_0, window_bounds = array<i64: 8, 2, 32>}, {transform_indices = @transform_1, window_bounds = array<i64: 8, 32>}, {transform_indices = @transform_2, window_bounds = array<i64: 8, 2, 32>}]} {
    %c0 = arith.constant 0 : index
    %c0_0 = arith.constant 0 : index
    %c0_1 = arith.constant 0 : index
    %0 = vector.load %arg3[%c0, %c0_0, %c0_1] : memref<8x2x32xf32, #tpu.memory_space<vmem>>, vector<8x2x32xf32>
    %c0_2 = arith.constant 0 : index
    %c0_3 = arith.constant 0 : index
    %1 = vector.load %arg4[%c0_2, %c0_3] : memref<8x32xf32, #tpu.memory_space<vmem>>, vector<8x32xf32>
    %2 = vector.shape_cast %1 : vector<8x32xf32> to vector<8x1x32xf32>
    %3 = vector.broadcast %2 : vector<8x1x32xf32> to vector<8x2x32xf32>
    %4 = arith.addf %0, %3 : vector<8x2x32xf32>
    %c0_4 = arith.constant 0 : index
    %c0_5 = arith.constant 0 : index
    %c0_6 = arith.constant 0 : index
    %5 = vector.load %arg5[%c0_4, %c0_5, %c0_6] : memref<8x2x32xf32, #tpu.memory_space<vmem>>, vector<8x2x32xf32>
    tpu.vector_store %arg5[%c0_4, %c0_5, %c0_6], %4 {strides = array<i32>} : memref<8x2x32xf32, #tpu.memory_space<vmem>>, vector<8x2x32xf32>,
    return
  }
  func.func @transform_0(%arg0: i32, %arg1: i32, %arg2: i32) -> (i32, i32, i32) {
    %c0_i32 = arith.constant 0 : i32
    return %arg0, %arg1, %arg2 : i32, i32, i32
  }
  func.func @transform_1(%arg0: i32, %arg1: i32, %arg2: i32) -> (i32, i32) {
    %c0_i32 = arith.constant 0 : i32
    return %arg0, %arg2 : i32, i32
  }
  func.func @transform_2(%arg0: i32, %arg1: i32, %arg2: i32) -> (i32, i32, i32) {
    %c0_i32 = arith.constant 0 : i32
    return %arg0, %arg1, %arg2 : i32, i32, i32
  }
}

</mosaic_0001>

<llo_original>
// kernel: tpu_custom_call.1
$region0: #{tpu_custom_call.1}
  #allocation0 [shape = 'u32[]', space=smem, size = 0x4, offset = 0x4, fixed_abs, tag = 'smem constant byte address 0x4 - core index']
  #allocation1 [shape = 'u32[144,128]{1,0:T(1,128)}', space=vmem, size = 0x12000, scoped, tag = 'internal scratch']
  %s0 = inlined_call_operand.vmem [shape: f32[8,2,32], index: 0, kind: input, shape index: {}]
  %s1 = inlined_call_operand.vmem [shape: f32[64,32], index: 1, kind: input, shape index: {}]
  %s2 = inlined_call_operand.hbm [shape: f32[8,2,32], index: 2, kind: output, shape index: {}]
  %s3 = sld [smem:[#allocation0]]
  $region18: #{tpu_custom_call.1} parent=0
    _
  %s5 = ssub.s32 1, %s3
  %s6 = scalar_select 0, %s5, %s3
  $region1: #{tpu_custom_call.1} parent=0
    #allocation2 [shape = 'u8[8192]{0}', space=vmem, size = 0x2000, scoped, tag = 'output window, operand 0, single buffered']
    #allocation3 [shape = 's32[1]{0}', space=sflag, size = 0x4, scoped, tag = 'scoped memory for tpu_custom_call.1']
    %7 = vsyncpa [#allocation3], 0
    // Predicated region
    $region2: #{tpu_custom_call.1} parent=1 // pred_check
      _
    $region3: #{tpu_custom_call.1} parent=1 // pred_check_branch
      %9 = sbr.rel (0) target = $region5
    $region4: #{tpu_custom_call.1} parent=1 // pred_region
      _
    $region5: #{tpu_custom_call.1} parent=1 // pred_fallthru
      _
    // Predicated region
    $region6: #{tpu_custom_call.1} parent=1 // pred_check
      _
    $region7: #{tpu_custom_call.1} parent=1 // pred_check_branch
      %11 = sbr.rel (0) target = $region9
    $region8: #{tpu_custom_call.1} parent=1 // pred_region
      _
    $region9: #{tpu_custom_call.1} parent=1 // pred_fallthru
      _
    %v12 = vld [vmem:[%s0] sm:$0x3]
    %v13 = vld [vmem:[%s0 + $0x2] sm:$0x3]
    %v14 = vld [vmem:[%s0 + $0x4] sm:$0x3]
    %v15 = vld [vmem:[%s0 + $0x6] sm:$0x3]
    %v16 = vld [vmem:[%s0 + $0x8] sm:$0x3]
    %v17 = vld [vmem:[%s0 + $0xa] sm:$0x3]
    %v18 = vld [vmem:[%s0 + $0xc] sm:$0x3]
    %v19 = vld [vmem:[%s0 + $0xe] sm:$0x3]
    %v20 = vld [vmem:[%s1] sm:$0xff]
    %v22 = vcombine.high %v20, %v20
    %v24 = vunpack.c.l.s4 1966171168
    %v25 = vunpack.c.0.s8 %v24
    %v26 = vlaneseq
    %v27 = vshrl.u32 %v26, 7
    %v28 = vsub.s32 %v25, %v27
    %v29 = vrot.slane %v20, %v28
    %v31 = vunpack.c.l.s4 1966171168
    %v32 = vunpack.c.0.s8 %v31
    %v33 = vlaneseq
    %v34 = vshrl.u32 %v33, 7
    %v35 = vsub.s32 %v32, %v34
    %v36 = vrot.slane %v22, %v35
    %v37 = vcombine.high %v29, %v29
    %v38 = vcombine.high %v36, %v36
    %v40 = vunpack.c.l.s4 1966171168
    %v41 = vunpack.c.0.s8 %v40
    %v42 = vlaneseq
    %v43 = vshrl.u32 %v42, 7
    %v44 = vsub.s32 %v41, %v43
    %v45 = vrot.slane %v29, %v44
    %v47 = vunpack.c.l.s4 1966171168
    %v48 = vunpack.c.0.s8 %v47
    %v49 = vlaneseq
    %v50 = vshrl.u32 %v49, 7
    %v51 = vsub.s32 %v48, %v50
    %v52 = vrot.slane %v36, %v51
    %v54 = vunpack.c.l.s4 1966171168
    %v55 = vunpack.c.0.s8 %v54
    %v56 = vlaneseq
    %v57 = vshrl.u32 %v56, 7
    %v58 = vsub.s32 %v55, %v57
    %v59 = vrot.slane %v37, %v58
    %v61 = vunpack.c.l.s4 1966171168
    %v62 = vunpack.c.0.s8 %v61
    %v63 = vlaneseq
    %v64 = vshrl.u32 %v63, 7
    %v65 = vsub.s32 %v62, %v64
    %v66 = vrot.slane %v38, %v65
    %v67 = vcombine.high %v45, %v45
    %v68 = vcombine.high %v52, %v52
    %v69 = vcombine.high %v59, %v59
    %v70 = vcombine.high %v66, %v66
    %v71 = vlaneseq
    %v72 = vshrl.u32 %v71, 7
    %v73 = vsub.s32 0, %v72
    %v74 = vrot.slane %v45, %v73
    %v75 = vlaneseq
    %v76 = vshrl.u32 %v75, 7
    %v77 = vsub.s32 0, %v76
    %v78 = vrot.slane %v59, %v77
    %v79 = vlaneseq
    %v80 = vshrl.u32 %v79, 7
    %v81 = vsub.s32 0, %v80
    %v82 = vrot.slane %v67, %v81
    %v83 = vlaneseq
    %v84 = vshrl.u32 %v83, 7
    %v85 = vsub.s32 0, %v84
    %v86 = vrot.slane %v69, %v85
    %v87 = vlaneseq
    %v88 = vshrl.u32 %v87, 7
    %v89 = vsub.s32 0, %v88
    %v90 = vrot.slane %v52, %v89
    %v91 = vlaneseq
    %v92 = vshrl.u32 %v91, 7
    %v93 = vsub.s32 0, %v92
    %v94 = vrot.slane %v66, %v93
    %v95 = vlaneseq
    %v96 = vshrl.u32 %v95, 7
    %v97 = vsub.s32 0, %v96
    %v98 = vrot.slane %v68, %v97
    %v99 = vlaneseq
    %v100 = vshrl.u32 %v99, 7
    %v101 = vsub.s32 0, %v100
    %v102 = vrot.slane %v70, %v101
    %v111 = vadd.f32 %v12, %v74
    %v112 = vadd.f32 %v13, %v78
    %v113 = vadd.f32 %v14, %v82
    %v114 = vadd.f32 %v15, %v86
    %v115 = vadd.f32 %v16, %v90
    %v116 = vadd.f32 %v17, %v94
    %v117 = vadd.f32 %v18, %v98
    %v118 = vadd.f32 %v19, %v102
    %vm119 = vcmask 254976
    %120 = vst.msk [vmem:[#allocation2] sm:$0x3] %vm119, %v111
    %121 = vst.msk [vmem:[#allocation2 + $0x2] sm:$0x3] %vm119, %v112
    %122 = vst.msk [vmem:[#allocation2 + $0x4] sm:$0x3] %vm119, %v113
    %123 = vst.msk [vmem:[#allocation2 + $0x6] sm:$0x3] %vm119, %v114
    %124 = vst.msk [vmem:[#allocation2 + $0x8] sm:$0x3] %vm119, %v115
    %125 = vst.msk [vmem:[#allocation2 + $0xa] sm:$0x3] %vm119, %v116
    %126 = vst.msk [vmem:[#allocation2 + $0xc] sm:$0x3] %vm119, %v117
    %127 = vst.msk [vmem:[#allocation2 + $0xe] sm:$0x3] %vm119, %v118
    // Predicated region
    $region10: #{tpu_custom_call.1} parent=1 // pred_check
      _
    $region11: #{tpu_custom_call.1} parent=1 // pred_check_branch
      %129 = sbr.rel (0) target = $region13
    $region12: #{tpu_custom_call.1} parent=1 // pred_region
      %s131 = ssub.s32 256, 256
      %132 = vsyncadd [#allocation3], %s131
      %s133 = sshll.u32 [#allocation2], 4
      %s134 = int_to_ptr.vmem [resolvable:$true] %s133
      %139 = dma.vmem_to_hbm [thread:$0]  %s134, 256, %s2, [#allocation3], 32, 32, 2
    $region13: #{tpu_custom_call.1} parent=1 // pred_fallthru
      _
    // Predicated region
    $region14: #{tpu_custom_call.1} parent=1 // pred_check
      _
    $region15: #{tpu_custom_call.1} parent=1 // pred_check_branch
      %141 = sbr.rel (0) target = $region17
    $region16: #{tpu_custom_call.1} parent=1 // pred_region
      %142 = dma.done [#allocation3], 256
    $region17: #{tpu_custom_call.1} parent=1 // pred_fallthru
      _
    %143 = vsyncpa [#allocation3], 1

</llo_original>
